<compile_context>
chip_gen: v7x
topology: tpu7x:2x2x1
jax: 0.10.0
libtpu: 0.0.40
codegen_flags: <defaults>
</compile_context>

<pallas_src>
import jax
import jax.numpy as jnp
from jax.experimental import pallas as pl
from jax.experimental.pallas import tpu as pltpu

PRED_LEN = 4      # ModelConfig.pred_len
HIDDEN = 64       # GRUCell hidden size

IMAGENET_MEAN = (0.485, 0.456, 0.406)
IMAGENET_STD = (0.229, 0.224, 0.225)


def _round_up(x, m):
    return ((x + m - 1) // m) * m


def _vmem_capacity_bytes():
    """Per-generation VMEM capacity; conservative v7x floor if query fails."""
    try:
        cap = int(pltpu.get_tpu_info().vmem_capacity_bytes)
        if cap > 0:
            return cap
    except Exception:
        pass
    return 64 * 1024 * 1024


def _pick_hw_tile(hw, rows, dtype_bytes, n_streams):
    """Byte-budgeted lane-tile (multiple of 128).

    Budget accounts for: all n_streams camera inputs, 2x double-buffering, and
    the sublane padding of the row axis (rows -> next multiple of 8).  Derived
    from the generation's VMEM capacity with headroom left for outputs and
    compiler scratch, so the same code fits v7x's 64 MiB and uses more on
    v5e/v6e's 128 MiB.
    """
    rows_pad = _round_up(max(rows, 1), 8)
    budget = _vmem_capacity_bytes() // 4
    per_lane = n_streams * 2 * rows_pad * dtype_bytes
    max_lanes = max(budget // per_lane, 128)
    tile = min(_round_up(hw, 128), (max_lanes // 128) * 128)
    return max(tile, 128)


# ---------------------------------------------------------------------------
# Kernel A: streaming per-tile channel-sum reduction (HBM-bandwidth bound).
#   grid = (n_hw_tiles,), dimension_semantics = ("parallel",): each grid step
#   is independent (distinct output block), so v7x can split tiles across its
#   two TensorCores.  Inputs stay in stored dtype; cast here is exact for sums.
# ---------------------------------------------------------------------------
def _channel_sum_kernel(*refs):
    out_ref = refs[-1]           # (1, rows, 1) partial-sum block for this tile
    img_refs = refs[:-1]         # n_img blocks of shape (rows, tile)

    acc = img_refs[0][...].astype(jnp.float32)
    for r in img_refs[1:]:
        acc = acc + r[...].astype(jnp.float32)

    # One cross-lane (XLU) reduce + one tiny store per multi-KB tile; both are
    # hidden under the dominant HBM DMA of the streamed slabs.
    out_ref[...] = jnp.sum(acc, axis=-1, keepdims=True)[None, :, :]


# ---------------------------------------------------------------------------
# Kernel B: one-shot epilogue — folded proxy encoder + join MLP + GRU rollout.
# ---------------------------------------------------------------------------
def _epilogue_kernel(csum_ref, tp_ref, wenc_ref, benc_ref,
                     w1_ref, b1_ref, w2_ref, b2_ref, w3_ref, b3_ref,
                     wih_ref, bih_ref, whh_ref, bhh_ref, wo_ref, bo_ref,
                     out_ref):
    s = csum_ref[...]                                     # (B, 3) raw pixel sums

    # TODO(synk): pretrained resnet34 backbone replaced by this proxy encoder
    # (GAP + Linear(3,512)).  ImageNet affine, 1/(255*HW) and the cross-image
    # sum are pre-folded into wenc/benc in the wrapper; K=3 matmul done as VPU
    # broadcast-MACs (too narrow for the MXU).
    code = (s[:, 0:1] * wenc_ref[0:1, :]
            + s[:, 1:2] * wenc_ref[1:2, :]
            + s[:, 2:3] * wenc_ref[2:3, :]
            + benc_ref[...])                              # (B, 512)

    # join MLP: 512 -> 256 -> 128 -> 64, ReLU after each.
    h = jnp.maximum(
        jnp.dot(code, w1_ref[...], preferred_element_type=jnp.float32)
        + b1_ref[...], 0.0)
    h = jnp.maximum(
        jnp.dot(h, w2_ref[...], preferred_element_type=jnp.float32)
        + b2_ref[...], 0.0)
    h = jnp.maximum(
        jnp.dot(h, w3_ref[...], preferred_element_type=jnp.float32)
        + b3_ref[...], 0.0)                               # (B, 64)

    tp = tp_ref[...]                                      # (B, 2)
    x = jnp.zeros_like(tp)                                # torch.zeros((B, 2))

    wih = wih_ref[...]                                    # (2, 192)  [r|z|n]
    bih = bih_ref[...]                                    # (1, 192)
    whh = whh_ref[...]                                    # (64, 192) [r|z|n]
    bhh = bhh_ref[...]                                    # (1, 192)
    wo = wo_ref[...]                                      # (64, 2)
    bo = bo_ref[...]                                      # (1, 2)

    wps = []
    for _ in range(PRED_LEN):                             # static unrolled rollout
        x_in = x + tp
        # input-gate contribution (K=2): VPU broadcast-MACs, no MXU.
        gi = (x_in[:, 0:1] * wih[0:1, :]
              + x_in[:, 1:2] * wih[1:2, :] + bih)         # (B, 192)
        # hidden-gate contribution: single (B,64)x(64,192) MXU dot per step.
        gh = jnp.dot(h, whh, preferred_element_type=jnp.float32) + bhh
        r = jax.nn.sigmoid(gi[:, 0:HIDDEN] + gh[:, 0:HIDDEN])
        z = jax.nn.sigmoid(gi[:, HIDDEN:2 * HIDDEN] + gh[:, HIDDEN:2 * HIDDEN])
        ng = jnp.tanh(gi[:, 2 * HIDDEN:] + r * gh[:, 2 * HIDDEN:])
        h = (1.0 - z) * ng + z * h                        # GRUCell hidden update
        dx = jnp.dot(h, wo, preferred_element_type=jnp.float32) + bo
        x = x + dx
        wps.append(x)

    # Lane-dense output: (B, PRED_LEN*2); reshaped to (B, PRED_LEN, 2) outside.
    out_ref[...] = jnp.concatenate(wps, axis=1)


# ---------------------------------------------------------------------------
# Wrapper: mirrors Model.forward(data) -> pred_wp of shape (B, pred_len, 2)
# ---------------------------------------------------------------------------
def model_forward(params, data):
    images = data['images']                                    # list of (B, 3, H, W)
    target_point = data['target_point'].astype(jnp.float32)    # (B, 2)
    # data['lidars'], data['velocity'], data['command'] are unpacked but unused
    # by the PyTorch forward compute -- same here.

    n_img = len(images)
    B, C, H, W = images[0].shape
    hw = H * W
    rows = B * C
    dtype_bytes = jnp.dtype(images[0].dtype).itemsize

    tile = _pick_hw_tile(hw, rows, dtype_bytes, n_img)
    hw_pad = _round_up(hw, tile)
    n_hw = hw_pad // tile

    # Metadata-only reshapes (no copy, no dtype cast): channel dim folded onto
    # the sublane axis, images kept in their stored dtype (uint8 is fine -- the
    # cast happens in-kernel and the channel sum is exact in any dtype).
    # Zero padding (only when H*W doesn't tile cleanly) is exact for a sum.
    imgs2d = []
    for img in images:
        x = img.reshape(rows, hw)
        if hw_pad > hw:
            x = jnp.pad(x, ((0, 0), (0, hw_pad - hw)))
        imgs2d.append(x)

    rows_pad = _round_up(rows, 8)
    stream_bytes = n_img * 2 * rows_pad * tile * 4             # dbl-buffered, f32 worst case
    vmem_limit = int(min(stream_bytes + (8 << 20), _vmem_capacity_bytes()))

    # If DMA gaps appear at very large tiles, bump the image specs to
    # pipeline_mode=pl.Buffered(3); default double-buffering is already
    # accounted for in the byte budget above.
    img_spec = pl.BlockSpec((rows, tile), lambda t: (0, t))

    partials = pl.pallas_call(
        _channel_sum_kernel,
        out_shape=jax.ShapeDtypeStruct((n_hw, rows, 1), jnp.float32),
        grid_spec=pltpu.PrefetchScalarGridSpec(
            num_scalar_prefetch=0,
            grid=(n_hw,),
            in_specs=[img_spec] * n_img,
            out_specs=pl.BlockSpec((1, rows, 1), lambda t: (t, 0, 0)),
        ),
        compiler_params=pltpu.CompilerParams(
            dimension_semantics=("parallel",),          # megacore-friendly on v7x
            vmem_limit_bytes=vmem_limit),
    )(*imgs2d)

    # Tiny cross-tile reduction + (B,3) reshape in plain JAX (n_hw*B*3 floats).
    csum = partials.reshape(n_hw, rows).sum(axis=0).reshape(B, C)   # raw pixel sums

    # Fold normalize_imagenet + GAP(1/(255*HW)) + sum over n_img images into the
    # proxy-encoder weights (exact: the whole chain is affine in the pixels).
    k = jnp.array([1.0 / (255.0 * hw * s) for s in IMAGENET_STD], jnp.float32)
    c0 = jnp.array([-float(n_img) * m / s
                    for m, s in zip(IMAGENET_MEAN, IMAGENET_STD)], jnp.float32)
    wenc_fold = params['wenc'] * k[:, None]                             # (3, 512)
    benc_fold = c0[None, :] @ params['wenc'] + float(n_img) * params['benc']  # (1, 512)

    def full(shape):
        return pl.BlockSpec(shape, lambda i, _s=shape: (0,) * len(_s))

    out = pl.pallas_call(
        _epilogue_kernel,
        out_shape=jax.ShapeDtypeStruct((B, PRED_LEN * 2), jnp.float32),
        grid_spec=pltpu.PrefetchScalarGridSpec(
            num_scalar_prefetch=0,
            grid=(1,),
            in_specs=[
                full((B, 3)), full((B, 2)),
                full((3, 512)), full((1, 512)),                 # folded proxy encoder
                full((512, 256)), full((1, 256)),               # join[0]
                full((256, 128)), full((1, 128)),               # join[2]
                full((128, 64)), full((1, 64)),                 # join[4]
                full((2, 3 * HIDDEN)), full((1, 3 * HIDDEN)),   # GRU W_ih, b_ih
                full((HIDDEN, 3 * HIDDEN)), full((1, 3 * HIDDEN)),  # GRU W_hh, b_hh
                full((HIDDEN, 2)), full((1, 2)),                # output head
            ],
            out_specs=pl.BlockSpec((B, PRED_LEN * 2), lambda i: (0, 0)),
        ),
        compiler_params=pltpu.CompilerParams(
            dimension_semantics=("arbitrary",)),
    )(csum, target_point, wenc_fold, benc_fold,
      params['w1'], params['b1'], params['w2'], params['b2'],
      params['w3'], params['b3'],
      params['wih_cat'], params['bih_cat'], params['whh_cat'], params['bhh_cat'],
      params['wo'], params['bo'])

    return out.reshape(B, PRED_LEN, 2)


# ---------------------------------------------------------------------------
# Deterministic parameter init (PyTorch-style uniform(-1/sqrt(fan_in), ...))
# GRU gate weights stored pre-transposed and concatenated column-wise [r|z|n].
# ---------------------------------------------------------------------------
def init_params(key):
    ks = jax.random.split(key, 16)

    def lin(kw, kb, fan_in, fan_out):
        bound = 1.0 / (fan_in ** 0.5)
        w = jax.random.uniform(kw, (fan_in, fan_out), jnp.float32, -bound, bound)
        b = jax.random.uniform(kb, (1, fan_out), jnp.float32, -bound, bound)
        return w, b

    p = {}
    p['wenc'], p['benc'] = lin(ks[0], ks[1], 3, 512)       # proxy encoder head
    p['w1'], p['b1'] = lin(ks[2], ks[3], 512, 256)         # join[0]
    p['w2'], p['b2'] = lin(ks[4], ks[5], 256, 128)         # join[2]
    p['w3'], p['b3'] = lin(ks[6], ks[7], 128, 64)          # join[4]
    hb = 1.0 / (HIDDEN ** 0.5)                             # GRUCell(2, 64)
    p['wih_cat'] = jax.random.uniform(ks[8], (2, 3 * HIDDEN), jnp.float32, -hb, hb)
    p['whh_cat'] = jax.random.uniform(ks[9], (HIDDEN, 3 * HIDDEN), jnp.float32, -hb, hb)
    p['bih_cat'] = jax.random.uniform(ks[10], (1, 3 * HIDDEN), jnp.float32, -hb, hb)
    p['bhh_cat'] = jax.random.uniform(ks[11], (1, 3 * HIDDEN), jnp.float32, -hb, hb)
    p['wo'], p['bo'] = lin(ks[12], ks[13], HIDDEN, 2)      # output head
    return p


# ---------------------------------------------------------------------------
# Pure-JAX reference of the same forward (for a correctness sanity check)
# ---------------------------------------------------------------------------
def reference_forward(params, data):
    hp = jax.lax.Precision.HIGHEST
    mean = jnp.array(IMAGENET_MEAN, jnp.float32).reshape(1, 3, 1, 1)
    std = jnp.array(IMAGENET_STD, jnp.float32).reshape(1, 3, 1, 1)
    c = 0.0
    for img in data['images']:
        xn = (img.astype(jnp.float32) / 255.0 - mean) / std
        gap = jnp.mean(xn, axis=(2, 3))                               # (B, 3)
        c = c + jnp.dot(gap, params['wenc'], precision=hp) + params['benc']
    h = jax.nn.relu(jnp.dot(c, params['w1'], precision=hp) + params['b1'])
    h = jax.nn.relu(jnp.dot(h, params['w2'], precision=hp) + params['b2'])
    h = jax.nn.relu(jnp.dot(h, params['w3'], precision=hp) + params['b3'])
    tp = data['target_point'].astype(jnp.float32)
    x = jnp.zeros_like(tp)
    wps = []
    for _ in range(PRED_LEN):
        x_in = x + tp
        gi = jnp.dot(x_in, params['wih_cat'], precision=hp) + params['bih_cat']
        gh = jnp.dot(h, params['whh_cat'], precision=hp) + params['bhh_cat']
        r = jax.nn.sigmoid(gi[:, :HIDDEN] + gh[:, :HIDDEN])
        z = jax.nn.sigmoid(gi[:, HIDDEN:2 * HIDDEN] + gh[:, HIDDEN:2 * HIDDEN])
        n = jnp.tanh(gi[:, 2 * HIDDEN:] + r * gh[:, 2 * HIDDEN:])
        h = (1.0 - z) * n + z * h
        dx = jnp.dot(h, params['wo'], precision=hp) + params['bo']
        x = x + dx
        wps.append(x)
    return jnp.stack(wps, axis=1)


if __name__ == "__main__":
    key = jax.random.PRNGKey(0)
    kp, k1, k2, ktp = jax.random.split(key, 4)
    params = init_params(kp)

    B, H, W = 2, 16, 16
    data = {
        'images': [jax.random.uniform(k1, (B, 3, H, W), jnp.float32, 0.0, 255.0),
                   jax.random.uniform(k2, (B, 3, H, W), jnp.float32, 0.0, 255.0)],
        'lidars': [jnp.zeros((B, 2, H, W), jnp.float32)],   # unused by forward compute
        'velocity': jnp.zeros((B,), jnp.float32),           # unused by forward compute
        'command': jnp.zeros((B,), jnp.float32),            # unused by forward compute
        'target_point': jax.random.normal(ktp, (B, 2), jnp.float32),
    }

    pred_wp = model_forward(params, data)
    jax.block_until_ready(pred_wp)
    assert pred_wp.shape == (B, PRED_LEN, 2)
    assert pred_wp.dtype == jnp.float32

    ref = reference_forward(params, data)
    assert jnp.allclose(pred_wp, ref, rtol=5e-2, atol=5e-2), (pred_wp, ref)
    print("KERNEL_OK")
</pallas_src>

<mosaic_0001>
module attributes {stable_mosaic.version = 11 : i64} {
  func.func @_channel_sum_kernel(%arg0: i32, %arg1: memref<6x256xf32, #tpu.memory_space<vmem>>, %arg2: memref<6x256xf32, #tpu.memory_space<vmem>>, %arg3: memref<1x6x1xf32, #tpu.memory_space<vmem>>) attributes {dimension_semantics = [#tpu.dimension_semantics<parallel>], iteration_bounds = array<i64: 1>, scalar_prefetch = 0 : i64, scratch_operands = 0 : i64, tpu.core_type = #tpu.core_type<tc>, window_params = [{transform_indices = @transform_0, window_bounds = array<i64: 6, 256>}, {transform_indices = @transform_1, window_bounds = array<i64: 6, 256>}, {transform_indices = @transform_2, window_bounds = array<i64: 1, 6, 1>}]} {
    %c0 = arith.constant 0 : index
    %c0_0 = arith.constant 0 : index
    %0 = vector.load %arg1[%c0, %c0_0] : memref<6x256xf32, #tpu.memory_space<vmem>>, vector<6x256xf32>
    %c0_1 = arith.constant 0 : index
    %c0_2 = arith.constant 0 : index
    %1 = vector.load %arg2[%c0_1, %c0_2] : memref<6x256xf32, #tpu.memory_space<vmem>>, vector<6x256xf32>
    %2 = arith.addf %0, %1 : vector<6x256xf32>
    %cst = arith.constant dense<0.000000e+00> : vector<6xf32>
    %3 = vector.multi_reduction <add>, %2, %cst [1] : vector<6x256xf32> to vector<6xf32>
    %4 = vector.shape_cast %3 : vector<6xf32> to vector<6x1xf32>
    %5 = vector.shape_cast %4 : vector<6x1xf32> to vector<1x6x1xf32>
    %c0_3 = arith.constant 0 : index
    %c0_4 = arith.constant 0 : index
    %c0_5 = arith.constant 0 : index
    %6 = vector.load %arg3[%c0_3, %c0_4, %c0_5] : memref<1x6x1xf32, #tpu.memory_space<vmem>>, vector<1x6x1xf32>
    tpu.vector_store %arg3[%c0_3, %c0_4, %c0_5], %5 {strides = array<i32>} : memref<1x6x1xf32, #tpu.memory_space<vmem>>, vector<1x6x1xf32>,
    return
  }
  func.func @transform_0(%arg0: i32) -> (i32, i32) {
    %c0_i32 = arith.constant 0 : i32
    %c0_i32_0 = arith.constant 0 : i32
    return %c0_i32, %arg0 : i32, i32
  }
  func.func @transform_1(%arg0: i32) -> (i32, i32) {
    %c0_i32 = arith.constant 0 : i32
    %c0_i32_0 = arith.constant 0 : i32
    return %c0_i32, %arg0 : i32, i32
  }
  func.func @transform_2(%arg0: i32) -> (i32, i32, i32) {
    %c0_i32 = arith.constant 0 : i32
    %c0_i32_0 = arith.constant 0 : i32
    %c0_i32_1 = arith.constant 0 : i32
    return %arg0, %c0_i32, %c0_i32_0 : i32, i32, i32
  }
}

</mosaic_0001>

<llo_original>
// kernel: tpu_custom_call.1
$region0: #{tpu_custom_call.1}
  #allocation0 [shape = 'u32[]', space=smem, size = 0x4, offset = 0x4, fixed_abs, tag = 'smem constant byte address 0x4 - core index']
  #allocation1 [shape = 'u32[144,128]{1,0:T(1,128)}', space=vmem, size = 0x12000, scoped, tag = 'internal scratch']
  %s0 = inlined_call_operand.hbm [shape: f32[6,256], index: 0, kind: input, shape index: {}]
  %s1 = inlined_call_operand.hbm [shape: f32[6,256], index: 1, kind: input, shape index: {}]
  %s2 = inlined_call_operand.vmem [shape: f32[1,6,1], index: 2, kind: output, shape index: {}]
  %s3 = sld [smem:[#allocation0]]
  $region26: #{tpu_custom_call.1} parent=0
    _
  %s5 = ssub.s32 1, %s3
  %s6 = scalar_select 0, %s5, %s3
  $region1: #{tpu_custom_call.1} parent=0
    #allocation2 [shape = 'u8[8192]{0}', space=vmem, size = 0x2000, scoped, tag = 'input window, operand 0, single buffered']
    #allocation3 [shape = 's32[1]{0}', space=sflag, size = 0x4, scoped, tag = 'scoped memory for tpu_custom_call.1']
    #allocation4 [shape = 'u8[8192]{0}', space=vmem, size = 0x2000, scoped, tag = 'input window, operand 1, single buffered']
    #allocation5 [shape = 's32[1]{0}', space=sflag, size = 0x4, scoped, tag = 'scoped memory for tpu_custom_call.1']
    %7 = vsyncpa [#allocation3], 0
    %8 = vsyncpa [#allocation5], 0
    // Predicated region
    $region2: #{tpu_custom_call.1} parent=1 // pred_check
      _
    $region3: #{tpu_custom_call.1} parent=1 // pred_check_branch
      %10 = sbr.rel (0) target = $region5
    $region4: #{tpu_custom_call.1} parent=1 // pred_region
      %s12 = ssub.s32 256, 256
      %13 = vsyncadd [#allocation3], %s12
      %s15 = sshll.u32 [#allocation2], 4
      %s16 = int_to_ptr.vmem [resolvable:$true] %s15
      %18 = dma.hbm_to_vmem [thread:$0]  %s0, 256, %s16, [#allocation3]
    $region5: #{tpu_custom_call.1} parent=1 // pred_fallthru
      _
    // Predicated region
    $region6: #{tpu_custom_call.1} parent=1 // pred_check
      _
    $region7: #{tpu_custom_call.1} parent=1 // pred_check_branch
      %20 = sbr.rel (0) target = $region9
    $region8: #{tpu_custom_call.1} parent=1 // pred_region
      %s22 = ssub.s32 256, 256
      %23 = vsyncadd [#allocation5], %s22
      %s25 = sshll.u32 [#allocation4], 4
      %s26 = int_to_ptr.vmem [resolvable:$true] %s25
      %28 = dma.hbm_to_vmem [thread:$0]  %s1, 256, %s26, [#allocation5]
    $region9: #{tpu_custom_call.1} parent=1 // pred_fallthru
      _
    // Predicated region
    $region10: #{tpu_custom_call.1} parent=1 // pred_check
      _
    $region11: #{tpu_custom_call.1} parent=1 // pred_check_branch
      %30 = sbr.rel (0) target = $region13
    $region12: #{tpu_custom_call.1} parent=1 // pred_region
      %31 = dma.done [#allocation3], 256
    $region13: #{tpu_custom_call.1} parent=1 // pred_fallthru
      _
    // Predicated region
    $region14: #{tpu_custom_call.1} parent=1 // pred_check
      _
    $region15: #{tpu_custom_call.1} parent=1 // pred_check_branch
      %33 = sbr.rel (0) target = $region17
    $region16: #{tpu_custom_call.1} parent=1 // pred_region
      %34 = dma.done [#allocation5], 256
    $region17: #{tpu_custom_call.1} parent=1 // pred_fallthru
      _
    %v35 = vld [vmem:[#allocation2] sm:$0x3f]
    %v36 = vld [vmem:[#allocation2 + $0x8] sm:$0x3f]
    %v37 = vld [vmem:[#allocation4] sm:$0x3f]
    %v38 = vld [vmem:[#allocation4 + $0x8] sm:$0x3f]
    %v39 = vadd.f32 %v35, %v37
    %v40 = vadd.f32 %v36, %v38
    %vm41 = vcmask 1045504
    %v42 = vsel %vm41, %v39, 0.0
    %v43 = vsel %vm41, %v40, 0.0
    %v44 = vadd.f32 %v42, %v43
    %45 = vadd.xlane.f32.xlu0 %v44
    %v46 = vpop.xlane.xlu0 %45
    %vm47 = vcmask 5120
    %48 = vst.msk [vmem:[%s2] sm:$0x3f] %vm47, %v46
    // Predicated region
    $region18: #{tpu_custom_call.1} parent=1 // pred_check
      _
    $region19: #{tpu_custom_call.1} parent=1 // pred_check_branch
      %50 = sbr.rel (0) target = $region21
    $region20: #{tpu_custom_call.1} parent=1 // pred_region
      _
    $region21: #{tpu_custom_call.1} parent=1 // pred_fallthru
      _
    // Predicated region
    $region22: #{tpu_custom_call.1} parent=1 // pred_check
      _
    $region23: #{tpu_custom_call.1} parent=1 // pred_check_branch
      %52 = sbr.rel (0) target = $region25
    $region24: #{tpu_custom_call.1} parent=1 // pred_region
      _
    $region25: #{tpu_custom_call.1} parent=1 // pred_fallthru
      _
    %53 = vsyncpa [#allocation3], 1
    %54 = vsyncpa [#allocation5], 1

</llo_original>
